<compile_context>
chip_gen: v5e
topology: v5e:2x2
jax: 0.10.0
libtpu: 0.0.40
codegen_flags: <defaults>
</compile_context>

<pallas_src>
from functools import partial

import jax
import jax.numpy as jnp
from jax.experimental import pallas as pl
from jax.experimental.pallas import tpu as pltpu


def label_smoothing_kernel(x_ref, tgt_ref, out_ref, acc_ref, *, n_rows, size,
                           padding_idx, smoothing, confidence):
    i = pl.program_id(0)

    @pl.when(i == 0)
    def _init():
        acc_ref[...] = jnp.zeros_like(acc_ref)

    x = x_ref[...].astype(jnp.float32)          # (TN, V) logits (f32 math in-tile)
    tgt = tgt_ref[...]                          # (TN, 1) int32 class ids
    tn, v = x.shape

    # --- numerically stable log_softmax pieces (logp = z - lse) ---
    m = jnp.max(x, axis=-1, keepdims=True)
    z = x - m
    lse = jnp.log(jnp.sum(jnp.exp(z), axis=-1, keepdims=True))

    # --- soft-target CE without materializing true_dist ---
    col = jax.lax.broadcasted_iota(jnp.int32, (tn, v), 1)
    sum_logp = jnp.sum(z, axis=-1, keepdims=True) - v * lse                # (TN,1)
    logp_pad = z[:, padding_idx:padding_idx + 1] - lse                     # (TN,1)
    logp_tgt = jnp.sum(jnp.where(col == tgt, z, 0.0), axis=-1,
                       keepdims=True) - lse                                # (TN,1)

    smooth_val = smoothing / (size - 2)
    per_row = -(smooth_val * (sum_logp - logp_pad - logp_tgt)
                + confidence * logp_tgt)                                   # (TN,1)

    # Mask padding-target rows and tail rows past N (tile may overhang the array).
    row = i * tn + jax.lax.broadcasted_iota(jnp.int32, (tn, 1), 0)
    valid = (tgt != padding_idx) & (row < n_rows)
    per_row = jnp.where(valid, per_row, 0.0)

    acc_ref[...] = acc_ref[...] + jnp.sum(per_row)

    @pl.when(i == pl.num_programs(0) - 1)
    def _finalize():
        # CrossEntropyLoss(reduction='mean') with soft targets divides by N
        # (all rows, including padding rows).
        out_ref[...] = acc_ref[...] * (1.0 / n_rows)


def label_smoothing_loss(x, target, *, size, padding_idx, smoothing,
                         block_rows=None):
    """x: (N, size) float logits (f32/bf16), target: (N,) int labels.
    Returns scalar f32 loss identical to LabelSmoothing.forward."""
    N, V = x.shape
    assert V == size
    confidence = 1.0 - smoothing
    tgt2d = target.astype(jnp.int32).reshape(N, 1)

    # Row-tile size: multiple of the sublane packing for the storage dtype.
    sub = 16 if x.dtype == jnp.bfloat16 else 8
    if block_rows is None:
        # ~8 MiB per input buffer => <=16 MiB double-buffered, safe on all gens.
        budget = 8 * 1024 * 1024
        rows = max(sub, budget // max(1, V * x.dtype.itemsize))
        block_rows = min(1024, (rows // sub) * sub)
    tn = min(block_rows, ((N + sub - 1) // sub) * sub)
    tn = max(sub, (tn // sub) * sub)
    grid = (pl.cdiv(N, tn),)

    # VMEM budget: double-buffered input tiles + f32 intermediates + slack.
    tile_in_bytes = tn * V * x.dtype.itemsize + tn * 4
    vmem_limit = int(min(100 * 1024 * 1024,
                         max(16 * 1024 * 1024,
                             2 * tile_in_bytes + 8 * tn * V * 4 + (1 << 20))))

    kernel = partial(label_smoothing_kernel, n_rows=N, size=size,
                     padding_idx=padding_idx, smoothing=smoothing,
                     confidence=confidence)

    out = pl.pallas_call(
        kernel,
        out_shape=jax.ShapeDtypeStruct((1, 1), jnp.float32),
        grid=grid,
        in_specs=[pl.BlockSpec((tn, V), lambda i: (i, 0)),
                  pl.BlockSpec((tn, 1), lambda i: (i, 0))],
        out_specs=pl.BlockSpec((1, 1), lambda i: (0, 0)),
        scratch_shapes=[pltpu.VMEM((1, 1), jnp.float32)],
        compiler_params=pltpu.CompilerParams(
            dimension_semantics=("arbitrary",),
            vmem_limit_bytes=vmem_limit),
    )(x, tgt2d)
    return out[0, 0]


def _reference(x, target, *, size, padding_idx, smoothing):
    """Pure-JAX mirror of the PyTorch forward (sanity check)."""
    x = x.astype(jnp.float32)
    N, V = x.shape
    confidence = 1.0 - smoothing
    logp = jax.nn.log_softmax(x, axis=1)
    true_dist = jnp.full((N, V), smoothing / (size - 2), jnp.float32)
    true_dist = true_dist.at[jnp.arange(N), target].set(confidence)
    true_dist = true_dist.at[:, padding_idx].set(0.0)
    true_dist = jnp.where((target == padding_idx)[:, None], 0.0, true_dist)
    return jnp.mean(-jnp.sum(true_dist * logp, axis=1))


if __name__ == "__main__":
    SIZE = 32          # vocab / class count
    PADDING_IDX = 0
    SMOOTHING = 0.1

    key = jax.random.PRNGKey(0)
    kx, kt = jax.random.split(key)

    # --- f32 input, multi-tile grid with a ragged tail (N=20, TN=8 -> 3 tiles) ---
    N = 20
    x = jax.random.normal(kx, (N, SIZE), dtype=jnp.float32)
    target = jax.random.randint(kt, (N,), 0, SIZE, dtype=jnp.int32)
    target = target.at[0].set(PADDING_IDX)   # exercise the padding-row mask

    loss = label_smoothing_loss(x, target, size=SIZE, padding_idx=PADDING_IDX,
                                smoothing=SMOOTHING, block_rows=8)
    loss = jax.block_until_ready(loss)
    ref = _reference(x, target, size=SIZE, padding_idx=PADDING_IDX,
                     smoothing=SMOOTHING)
    assert jnp.allclose(loss, ref, atol=1e-5, rtol=1e-5), (loss, ref)

    # --- bf16 storage input (half the HBM traffic); in-kernel math stays f32 ---
    x_bf16 = x.astype(jnp.bfloat16)
    loss_bf = label_smoothing_loss(x_bf16, target, size=SIZE,
                                   padding_idx=PADDING_IDX,
                                   smoothing=SMOOTHING, block_rows=16)
    loss_bf = jax.block_until_ready(loss_bf)
    ref_bf = _reference(x_bf16.astype(jnp.float32), target, size=SIZE,
                        padding_idx=PADDING_IDX, smoothing=SMOOTHING)
    assert jnp.allclose(loss_bf, ref_bf, atol=1e-4, rtol=1e-4), (loss_bf, ref_bf)

    print("KERNEL_OK")
</pallas_src>

<mosaic_0001>
module attributes {stable_mosaic.version = 11 : i64} {
  func.func @label_smoothing_kernel(%arg0: i32, %arg1: memref<8x32xf32, #tpu.memory_space<vmem>>, %arg2: memref<8x1xi32, #tpu.memory_space<vmem>>, %arg3: memref<1x1xf32, #tpu.memory_space<vmem>>, %arg4: memref<1x1xf32, #tpu.memory_space<vmem>>) attributes {dimension_semantics = [#tpu.dimension_semantics<arbitrary>], iteration_bounds = array<i64: 3>, scalar_prefetch = 0 : i64, scratch_operands = 1 : i64, tpu.core_type = #tpu.core_type<tc>, window_params = [{transform_indices = @transform_0, window_bounds = array<i64: 8, 32>}, {transform_indices = @transform_1, window_bounds = array<i64: 8, 1>}, {pipeline_mode = #tpu.pipeline_mode<synchronous>, transform_indices = @transform_2, window_bounds = array<i64: 1, 1>}]} {
    %c0_i32 = arith.constant 0 : i32
    %0 = arith.cmpi eq, %arg0, %c0_i32 : i32
    %1 = arith.extui %0 : i1 to i32
    %c0_i32_0 = arith.constant 0 : i32
    %2 = arith.cmpi ne, %1, %c0_i32_0 : i32
    scf.if %2 {
      %cst_20 = arith.constant 0.000000e+00 : f32
      %59 = vector.broadcast %cst_20 : f32 to vector<1x1xf32>
      %c0_21 = arith.constant 0 : index
      %c0_22 = arith.constant 0 : index
      %60 = vector.load %arg4[%c0_21, %c0_22] : memref<1x1xf32, #tpu.memory_space<vmem>>, vector<1x1xf32>
      tpu.vector_store %arg4[%c0_21, %c0_22], %59 {strides = array<i32>} : memref<1x1xf32, #tpu.memory_space<vmem>>, vector<1x1xf32>,
    } else {
    }
    %c0 = arith.constant 0 : index
    %c0_1 = arith.constant 0 : index
    %3 = vector.load %arg1[%c0, %c0_1] : memref<8x32xf32, #tpu.memory_space<vmem>>, vector<8x32xf32>
    %c0_2 = arith.constant 0 : index
    %c0_3 = arith.constant 0 : index
    %4 = vector.load %arg2[%c0_2, %c0_3] : memref<8x1xi32, #tpu.memory_space<vmem>>, vector<8x1xi32>
    %cst = arith.constant dense<0xFF800000> : vector<8xf32>
    %5 = vector.multi_reduction <maximumf>, %3, %cst [1] : vector<8x32xf32> to vector<8xf32>
    %6 = vector.shape_cast %5 : vector<8xf32> to vector<8x1xf32>
    %7 = vector.broadcast %6 : vector<8x1xf32> to vector<8x32xf32>
    %8 = arith.subf %3, %7 : vector<8x32xf32>
    %9 = math.exp %8 : vector<8x32xf32>
    %cst_4 = arith.constant dense<0.000000e+00> : vector<8xf32>
    %10 = vector.multi_reduction <add>, %9, %cst_4 [1] : vector<8x32xf32> to vector<8xf32>
    %11 = vector.shape_cast %10 : vector<8xf32> to vector<8x1xf32>
    %12 = math.log %11 : vector<8x1xf32>
    %13 = tpu.iota {dimensions = array<i32: 1>} : vector<8x32xi32>
    %cst_5 = arith.constant dense<0.000000e+00> : vector<8xf32>
    %14 = vector.multi_reduction <add>, %8, %cst_5 [1] : vector<8x32xf32> to vector<8xf32>
    %15 = vector.shape_cast %14 : vector<8xf32> to vector<8x1xf32>
    %cst_6 = arith.constant 3.200000e+01 : f32
    %16 = vector.broadcast %cst_6 : f32 to vector<8x1xf32>
    %17 = arith.mulf %16, %12 : vector<8x1xf32>
    %18 = arith.subf %15, %17 : vector<8x1xf32>
    %19 = vector.extract_strided_slice %8 {offsets = [0, 0], sizes = [8, 1], strides = [1, 1]} : vector<8x32xf32> to vector<8x1xf32>
    %20 = arith.subf %19, %12 : vector<8x1xf32>
    %21 = vector.broadcast %4 : vector<8x1xi32> to vector<8x32xi32>
    %22 = arith.cmpi eq, %13, %21 : vector<8x32xi32>
    %cst_7 = arith.constant 0.000000e+00 : f32
    %23 = vector.broadcast %cst_7 : f32 to vector<8x32xf32>
    %24 = arith.select %22, %8, %23 : vector<8x32xi1>, vector<8x32xf32>
    %cst_8 = arith.constant dense<0.000000e+00> : vector<8xf32>
    %25 = vector.multi_reduction <add>, %24, %cst_8 [1] : vector<8x32xf32> to vector<8xf32>
    %26 = vector.shape_cast %25 : vector<8xf32> to vector<8x1xf32>
    %27 = arith.subf %26, %12 : vector<8x1xf32>
    %28 = arith.subf %18, %20 : vector<8x1xf32>
    %29 = arith.subf %28, %27 : vector<8x1xf32>
    %cst_9 = arith.constant 0.00333333341 : f32
    %30 = vector.broadcast %cst_9 : f32 to vector<8x1xf32>
    %31 = arith.mulf %30, %29 : vector<8x1xf32>
    %cst_10 = arith.constant 0.899999976 : f32
    %32 = vector.broadcast %cst_10 : f32 to vector<8x1xf32>
    %33 = arith.mulf %32, %27 : vector<8x1xf32>
    %34 = arith.addf %31, %33 : vector<8x1xf32>
    %cst_11 = arith.constant 0.000000e+00 : f32
    %35 = vector.broadcast %cst_11 : f32 to vector<8x1xf32>
    %36 = arith.subf %35, %34 : vector<8x1xf32>
    %c8_i32 = arith.constant 8 : i32
    %37 = arith.muli %arg0, %c8_i32 : i32
    %38 = tpu.iota {dimensions = array<i32: 0>} : vector<8x1xi32>
    %39 = vector.broadcast %37 : i32 to vector<8x1xi32>
    %40 = arith.addi %39, %38 : vector<8x1xi32>
    %c0_i32_12 = arith.constant 0 : i32
    %41 = vector.broadcast %c0_i32_12 : i32 to vector<8x1xi32>
    %42 = arith.cmpi ne, %4, %41 : vector<8x1xi32>
    %c20_i32 = arith.constant 20 : i32
    %43 = vector.broadcast %c20_i32 : i32 to vector<8x1xi32>
    %44 = arith.cmpi slt, %40, %43 : vector<8x1xi32>
    %45 = arith.andi %42, %44 : vector<8x1xi1>
    %cst_13 = arith.constant 0.000000e+00 : f32
    %46 = vector.broadcast %cst_13 : f32 to vector<8x1xf32>
    %47 = arith.select %45, %36, %46 : vector<8x1xi1>, vector<8x1xf32>
    %c0_14 = arith.constant 0 : index
    %c0_15 = arith.constant 0 : index
    %48 = vector.load %arg4[%c0_14, %c0_15] : memref<1x1xf32, #tpu.memory_space<vmem>>, vector<1x1xf32>
    %49 = vector.shape_cast %47 : vector<8x1xf32> to vector<1x8x1xf32>
    %cst_16 = arith.constant dense<0.000000e+00> : vector<1xf32>
    %50 = vector.multi_reduction <add>, %49, %cst_16 [1, 2] : vector<1x8x1xf32> to vector<1xf32>
    %51 = vector.shape_cast %50 : vector<1xf32> to vector<1x1x1xf32>
    %52 = vector.extract %51[0, 0, 0] : f32 from vector<1x1x1xf32>
    %53 = vector.broadcast %52 : f32 to vector<1x1xf32>
    %54 = arith.addf %48, %53 : vector<1x1xf32>
    %c0_17 = arith.constant 0 : index
    %c0_18 = arith.constant 0 : index
    %55 = vector.load %arg4[%c0_17, %c0_18] : memref<1x1xf32, #tpu.memory_space<vmem>>, vector<1x1xf32>
    tpu.vector_store %arg4[%c0_17, %c0_18], %54 {strides = array<i32>} : memref<1x1xf32, #tpu.memory_space<vmem>>, vector<1x1xf32>,
    %c2_i32 = arith.constant 2 : i32
    %56 = arith.cmpi eq, %arg0, %c2_i32 : i32
    %57 = arith.extui %56 : i1 to i32
    %c0_i32_19 = arith.constant 0 : i32
    %58 = arith.cmpi ne, %57, %c0_i32_19 : i32
    scf.if %58 {
      %c0_20 = arith.constant 0 : index
      %c0_21 = arith.constant 0 : index
      %59 = vector.load %arg4[%c0_20, %c0_21] : memref<1x1xf32, #tpu.memory_space<vmem>>, vector<1x1xf32>
      %cst_22 = arith.constant 5.000000e-02 : f32
      %60 = vector.broadcast %cst_22 : f32 to vector<1x1xf32>
      %61 = arith.mulf %59, %60 : vector<1x1xf32>
      %c0_23 = arith.constant 0 : index
      %c0_24 = arith.constant 0 : index
      %62 = vector.load %arg3[%c0_23, %c0_24] : memref<1x1xf32, #tpu.memory_space<vmem>>, vector<1x1xf32>
      tpu.vector_store %arg3[%c0_23, %c0_24], %61 {strides = array<i32>} : memref<1x1xf32, #tpu.memory_space<vmem>>, vector<1x1xf32>,
    } else {
    }
    return
  }
  func.func @transform_0(%arg0: i32) -> (i32, i32) {
    %c0_i32 = arith.constant 0 : i32
    %c0_i32_0 = arith.constant 0 : i32
    return %arg0, %c0_i32 : i32, i32
  }
  func.func @transform_1(%arg0: i32) -> (i32, i32) {
    %c0_i32 = arith.constant 0 : i32
    %c0_i32_0 = arith.constant 0 : i32
    return %arg0, %c0_i32 : i32, i32
  }
  func.func @transform_2(%arg0: i32) -> (i32, i32) {
    %c0_i32 = arith.constant 0 : i32
    %c0_i32_0 = arith.constant 0 : i32
    %c0_i32_1 = arith.constant 0 : i32
    return %c0_i32, %c0_i32_0 : i32, i32
  }
}

</mosaic_0001>

<llo_original>
// kernel: tpu_custom_call.1
$region0: #{tpu_custom_call.1}
  #allocation0 [shape = 'u32[]', space=smem, size = 0x4, offset = 0x4, fixed_abs, tag = 'smem constant byte address 0x4 - core index']
  #allocation1 [shape = 'u32[72,128]{1,0:T(1,128)}', space=vmem, size = 0x9000, scoped, tag = 'internal scratch']
  #allocation2 [shape = 'f32[1,1]{1,0:T(1,128)}', space=vmem, size = 0x200, scoped, tag = 'scratch operand']
  %s0 = inlined_call_operand.vmem [shape: f32[20,32], index: 0, kind: input, shape index: {}]
  %s1 = inlined_call_operand.vmem [shape: s32[20,1], index: 1, kind: input, shape index: {}]
  %s2 = inlined_call_operand.hbm [shape: f32[1,1], index: 2, kind: output, shape index: {}]
  %s3 = sld [smem:[#allocation0]]
  $region49: #{tpu_custom_call.1} parent=0
    _
  %s5 = ssub.s32 1, %s3
  %s6 = scalar_select 0, %s5, %s3
  $region1: #{tpu_custom_call.1} parent=0
    #allocation3 [shape = 'u8[512]{0}', space=vmem, size = 0x400, scoped, tag = 'output window, operand 0, single buffered']
    #allocation4 [shape = 's32[2]{0}', space=sflag, size = 0x8, scoped, tag = 'scoped memory for tpu_custom_call.1']
    %7 = vsyncpa [#allocation4], 0
    loop: start=0, step=1, limit=5
    $region2: #{tpu_custom_call.1} parent=1 // loop_pre_header
      _
    $region3: #{tpu_custom_call.1} parent=1 // loop_header
      %s9 = sphi 0, %s13
      %p10 = scmp.ge.s32.totalorder %s9, 5
      %s19 = sphi 0, %s21
      %s22 = sphi 0, %s19
      %s23 = sphi 0, %s22
      %s39 = sphi 0, %s23
      %s45 = sphi 0, %s47
      %s48 = sphi 0, %s45
      %s49 = sphi 0, %s48
      %s65 = sphi 0, %s49
      %s69 = sphi 0, %s69
      %s71 = sphi 0, %s69
      %s72 = sphi 0, %s71
      %s86 = sphi 0, %s72
    $region4: #{tpu_custom_call.1} parent=1 // loop_header_branch
      %12 = sbr.rel (%p10) target = $region8
    $region5: #{tpu_custom_call.1} parent=1 // loop_body
      %s14 = ssub.s32 %s9, 1
      %s15 = ssub.s32 %s9, 2
      %s16 = sadd.s32 %s9, 1
      %s17 = ssub.s32 %s9, %s16
      %p18 = scmp.eq.s32.totalorder %s17, 0
      %s20 = sadd.s32 %s19, 1
      %s21 = scalar_select %p18, %s19, %s20
      %p24 = pneg %p18
      %p25 = scmp.eq.s32.totalorder %s9, 2
      %p26 = por %p24, %p25
      %p27 = scmp.ne.s32.totalorder %s19, %s22
      %p28 = scmp.eq.s32.totalorder %s9, 0
      %p29 = por %p27, %p28
      %p30 = scmp.ne.s32.totalorder %s19, %s22
      %p31 = scmp.eq.s32.totalorder %s14, 2
      %p32 = por %p30, %p31
      %p33 = scmp.ne.s32.totalorder %s22, %s23
      %p34 = scmp.eq.s32.totalorder %s14, 0
      %p35 = por %p33, %p34
      %p36 = scmp.ne.s32.totalorder %s22, %s23
      %p37 = scmp.eq.s32.totalorder %s15, 2
      %p38 = por %p36, %p37
      %p40 = scmp.ne.s32.totalorder %s23, %s39
      %p41 = scmp.eq.s32.totalorder %s15, 0
      %p42 = por %p40, %p41
      %s43 = ssub.s32 %s9, %s16
      %p44 = scmp.eq.s32.totalorder %s43, 0
      %s46 = sadd.s32 %s45, 1
      %s47 = scalar_select %p44, %s45, %s46
      %p50 = pneg %p44
      %p51 = scmp.eq.s32.totalorder %s9, 2
      %p52 = por %p50, %p51
      %p53 = scmp.ne.s32.totalorder %s45, %s48
      %p54 = scmp.eq.s32.totalorder %s9, 0
      %p55 = por %p53, %p54
      %p56 = scmp.ne.s32.totalorder %s45, %s48
      %p57 = scmp.eq.s32.totalorder %s14, 2
      %p58 = por %p56, %p57
      %p59 = scmp.ne.s32.totalorder %s48, %s49
      %p60 = scmp.eq.s32.totalorder %s14, 0
      %p61 = por %p59, %p60
      %p62 = scmp.ne.s32.totalorder %s48, %s49
      %p63 = scmp.eq.s32.totalorder %s15, 2
      %p64 = por %p62, %p63
      %p66 = scmp.ne.s32.totalorder %s49, %s65
      %p67 = scmp.eq.s32.totalorder %s15, 0
      %p68 = por %p66, %p67
      %s70 = sadd.s32 %s69, 1
      %p73 = scmp.eq.s32.totalorder %s9, 2
      %p74 = scmp.ne.s32.totalorder %s69, %s71
      %p75 = scmp.eq.s32.totalorder %s9, 0
      %p76 = por %p74, %p75
      %p77 = scmp.ne.s32.totalorder %s69, %s71
      %p78 = scmp.eq.s32.totalorder %s14, 2
      %p79 = por %p77, %p78
      %p80 = scmp.ne.s32.totalorder %s71, %s72
      %p81 = scmp.eq.s32.totalorder %s14, 0
      %p82 = por %p80, %p81
      %p83 = scmp.ne.s32.totalorder %s71, %s72
      %p84 = scmp.eq.s32.totalorder %s15, 2
      %p85 = por %p83, %p84
      %p87 = scmp.ne.s32.totalorder %s72, %s86
      %p88 = scmp.eq.s32.totalorder %s15, 0
      %p89 = por %p87, %p88
      %p90 = scmp.le.s32.totalorder 1, %s9
      %p91 = scmp.lt.s32.totalorder %s9, 4
      %p92 = pnand %p90, %p91
      %p93 = pneg %p92
      // Predicated region
      $region9: #{tpu_custom_call.1} parent=5 // pred_check
        _
      $region10: #{tpu_custom_call.1} parent=5 // pred_check_branch
        %95 = sbr.rel (%p92) target = $region12
      $region11: #{tpu_custom_call.1} parent=5 // pred_region
        %s96 = ssub.s32 %s9, 1
      $region12: #{tpu_custom_call.1} parent=5 // pred_fallthru
        _
      %p97 = scmp.lt.s32.totalorder %s9, 3
      // Predicated region
      $region13: #{tpu_custom_call.1} parent=5 // pred_check
        %p98 = pneg %p97
      $region14: #{tpu_custom_call.1} parent=5 // pred_check_branch
        %100 = sbr.rel (%p98) target = $region16
      $region15: #{tpu_custom_call.1} parent=5 // pred_region
        // Predicated region
        $region17: #{tpu_custom_call.1} parent=15 // pred_check
          %p101 = pneg %p29
        $region18: #{tpu_custom_call.1} parent=15 // pred_check_branch
          %103 = sbr.rel (%p101) target = $region20
        $region19: #{tpu_custom_call.1} parent=15 // pred_region
          %p104 = scmp.lt.s32.totalorder %s9, 2
          %s105 = scalar_select %p104, %s9, 2
          %s106 = smul.addr %s105, 8
          %s107 = scalar_lea.vmem %s0, %s106
        $region20: #{tpu_custom_call.1} parent=15 // pred_fallthru
          _
        // Predicated region
        $region21: #{tpu_custom_call.1} parent=15 // pred_check
          %p108 = pneg %p55
        $region22: #{tpu_custom_call.1} parent=15 // pred_check_branch
          %110 = sbr.rel (%p108) target = $region24
        $region23: #{tpu_custom_call.1} parent=15 // pred_region
          %p111 = scmp.lt.s32.totalorder %s9, 2
          %s112 = scalar_select %p111, %s9, 2
          %s113 = smul.addr %s112, 8
          %s114 = scalar_lea.vmem %s1, %s113
        $region24: #{tpu_custom_call.1} parent=15 // pred_fallthru
          _
      $region16: #{tpu_custom_call.1} parent=5 // pred_fallthru
        _
      %p115 = scmp.le.s32.totalorder 1, %s9
      %p116 = scmp.lt.s32.totalorder %s9, 4
      %p117 = pnand %p115, %p116
      %p118 = pneg %p117
      // Predicated region
      $region25: #{tpu_custom_call.1} parent=5 // pred_check
        _
      $region26: #{tpu_custom_call.1} parent=5 // pred_check_branch
        %120 = sbr.rel (%p117) target = $region28
      $region27: #{tpu_custom_call.1} parent=5 // pred_region
        %s121 = ssub.s32 %s9, 1
        %p122 = scmp.lt.s32.totalorder %s14, 2
        %s123 = scalar_select %p122, %s14, 2
        %s124 = smul.addr %s123, 8
        %s125 = scalar_lea.vmem %s0, %s124
        %p126 = pneg %p35
        %p127 = pneg %p32
        %p128 = scmp.lt.s32.totalorder %s14, 2
        %s129 = scalar_select %p128, %s14, 2
        %s130 = smul.addr %s129, 8
        %s131 = scalar_lea.vmem %s1, %s130
        %p132 = pneg %p61
        %p133 = pneg %p58
        %p134 = pneg %p82
        %p135 = pneg %p79
        %p136 = scmp.lt.s32.totalorder %s14, 2
        %s137 = scalar_select %p136, %s14, 2
        %s138 = smul.addr %s137, 8
        %s139 = scalar_lea.vmem %s0, %s138
        %p140 = scmp.lt.s32.totalorder %s14, 2
        %s141 = scalar_select %p140, %s14, 2
        %s142 = smul.addr %s141, 8
        %s143 = scalar_lea.vmem %s1, %s142
        %p144 = scmp.eq.s32.totalorder %s14, 0
        // Predicated region
        $region29: #{tpu_custom_call.1} parent=27 // pred_check
          %p145 = pneg %p144
        $region30: #{tpu_custom_call.1} parent=27 // pred_check_branch
          %147 = sbr.rel (%p145) target = $region32
        $region31: #{tpu_custom_call.1} parent=27 // pred_region
          %vm148 = vcmask 0
          %149 = vst.msk [vmem:[#allocation2] sm:$0x1] %vm148, 0.0
        $region32: #{tpu_custom_call.1} parent=27 // pred_fallthru
          _
        %v150 = vld [vmem:[%s139] sm:$0xff]
        %v151 = vld [vmem:[%s143] sm:$0xff]
        %vm152 = vcmask 261120
        %v153 = vsel %vm152, %v150, -inf
        %154 = vmax.xlane.f32.xlu0 %v153
        %v155 = vpop.xlane.xlu0 %154
        %v156 = vsub.f32 %v150, %v155
        %v157 = vmul.f32 %v156, 1.442695
        %v158 = vpow.pop %v157
        %v159 = vsel %vm152, %v158, 0.0
        %160 = vadd.xlane.f32.xlu0 %v159
        %v161 = vpop.xlane.xlu0 %160
        %v162 = vlog2.pop %v161
        %v163 = vmul.f32 %v162, 0.6931472
        %v164 = vlaneseq
        %v165 = vand.u32 %v164, 127
        %v166 = vsel %vm152, %v156, 0.0
        %167 = vadd.xlane.f32.xlu0 %v166
        %v168 = vpop.xlane.xlu0 %167
        %v169 = vmul.f32 %v163, 32.0
        %v170 = vsub.f32 %v168, %v169
        %v171 = vsub.f32 %v156, %v163
        %172 = vset.pattern.permute.xlu0 0
        %173 = vperm.xlu0 %172, %v151
        %v174 = vpop.permute.xlu0 %173
        %vm175 = vcmp.eq.s32.totalorder %v165, %v174
        %v176 = vsel %vm175, %v156, 0.0
        %v177 = vsel %vm152, %v176, 0.0
        %178 = vadd.xlane.f32.xlu0 %v177
        %v179 = vpop.xlane.xlu0 %178
        %v180 = vsub.f32 %v179, %v163
        %v181 = vsub.f32 %v170, %v171
        %v182 = vsub.f32 %v181, %v180
        %v183 = vmul.f32 %v182, 0.0033333334
        %v184 = vmul.f32 %v180, 0.9
        %v185 = vadd.f32 %v183, %v184
        %v186 = vsub.f32 0.0, %v185
        %s187 = smul.u32 %s14, 8
        %v188 = vlaneseq
        %v189 = vshrl.u32 %v188, 7
        %v190 = vstv %s187
        %v191 = vadd.s32 %v190, %v189
        %vm192 = vcmp.ne.s32.totalorder %v151, 0
        %vm193 = vcmp.lt.s32.totalorder %v191, 20
        %vm194 = vmand %vm192, %vm193
        %v195 = vsel %vm194, %v186, 0.0
        %v196 = vld [vmem:[#allocation2] sm:$0x1]
        %vm197 = vcmask 7168
        %v198 = vsel %vm197, %v195, 0.0
        %199 = vadd.xlane.f32.xlu0 %v198
        %v200 = vpop.xlane.xlu0 %199
        %v201 = vrot.slane %v200, 4
        %v202 = vadd.f32 %v200, %v201
        %v203 = vrot.slane %v202, 2
        %v204 = vadd.f32 %v202, %v203
        %v205 = vrot.slane %v204, 1
        %v206 = vadd.f32 %v204, %v205
        %s207 = vtos %v206
        %v208 = vstv %s207
        %v209 = vadd.f32 %v196, %v208
        %vm210 = vcmask 0
        %211 = vst.msk [vmem:[#allocation2] sm:$0x1] %vm210, %v209
        %p212 = scmp.eq.s32.totalorder %s14, 2
        // Predicated region
        $region33: #{tpu_custom_call.1} parent=27 // pred_check
          %p213 = pneg %p212
        $region34: #{tpu_custom_call.1} parent=27 // pred_check_branch
          %215 = sbr.rel (%p213) target = $region36
        $region35: #{tpu_custom_call.1} parent=27 // pred_region
          %v216 = vld [vmem:[#allocation2] sm:$0x1]
          %v217 = vmul.f32 %v216, 0.05
          %218 = vst.msk [vmem:[#allocation3] sm:$0x1] %vm210, %v217
        $region36: #{tpu_custom_call.1} parent=27 // pred_fallthru
          _
        // Predicated region
        $region37: #{tpu_custom_call.1} parent=27 // pred_check
          %p219 = pneg %p79
        $region38: #{tpu_custom_call.1} parent=27 // pred_check_branch
          %221 = sbr.rel (%p219) target = $region40
        $region39: #{tpu_custom_call.1} parent=27 // pred_region
          %223 = vsyncadd [#allocation4], 0
          %s225 = sshll.u32 [#allocation3], 4
          %s226 = int_to_ptr.vmem [resolvable:$true] %s225
          %s227 = sshll.u32 %s2, 4
          %s228 = int_to_ptr.hbm [resolvable:$true] %s227
          %230 = dma.vmem_to_hbm [thread:$0]  %s226, 16, %s228, [#allocation4]
        $region40: #{tpu_custom_call.1} parent=27 // pred_fallthru
          _
        // Predicated region
        $region41: #{tpu_custom_call.1} parent=27 // pred_check
          %p231 = pneg %p79
        $region42: #{tpu_custom_call.1} parent=27 // pred_check_branch
          %233 = sbr.rel (%p231) target = $region44
        $region43: #{tpu_custom_call.1} parent=27 // pred_region
          %235 = dma.done [#allocation4], 16
        $region44: #{tpu_custom_call.1} parent=27 // pred_fallthru
          _
      $region28: #{tpu_custom_call.1} parent=5 // pred_fallthru
        _
      %p236 = scmp.le.s32.totalorder 2, %s9
      // Predicated region
      $region45: #{tpu_custom_call.1} parent=5 // pred_check
        %p237 = pneg %p236
      $region46: #{tpu_custom_call.1} parent=5 // pred_check_branch
        %239 = sbr.rel (%p237) target = $region48
      $region47: #{tpu_custom_call.1} parent=5 // pred_region
        %s240 = ssub.s32 %s9, 2
      $region48: #{tpu_custom_call.1} parent=5 // pred_fallthru
        _
    $region6: #{tpu_custom_call.1} parent=1 // loop_footer
      %s13 = sadd.s32 1, %s9
    $region7: #{tpu_custom_call.1} parent=1 // loop_footer_branch
      %8 = sbr.rel target = $region3
    $region8: #{tpu_custom_call.1} parent=1 // loop_exit
      _
    %241 = vsyncpa [#allocation4], 1
    %s242 = scalar_lea.sflag [#allocation4], 1
    %243 = vsyncpa %s242, 1

</llo_original>
